<compile_context>
chip_gen: v6e
topology: v6e:2x2x1
jax: 0.10.0
libtpu: 0.0.40
codegen_flags: <defaults>
</compile_context>

<pallas_src>
import jax
import jax.numpy as jnp
from jax.experimental import pallas as pl
from jax.experimental.pallas import tpu as pltpu


def _gather_kernel(fidx_ref, p_ref, o_ref, acc_ref):
    """One grid step (kt, ht): gather TK points from the (NC, THW) param tile
    with a one-hot MXU matmul, accumulating over HW tiles."""
    ht = pl.program_id(1)

    @pl.when(ht == 0)
    def _():
        acc_ref[...] = jnp.zeros_like(acc_ref)

    thw = p_ref.shape[1]
    tk = o_ref.shape[1]
    idx = fidx_ref[0, :]                                      # (TK,) int32, VMEM
    row_ids = jax.lax.broadcasted_iota(jnp.int32, (thw, tk), 0) + ht * thw
    onehot = (row_ids == idx[None, :]).astype(p_ref.dtype)    # (THW, TK)
    # Exact: each column of `onehot` has at most one nonzero (== 1.0).
    acc_ref[...] += jnp.dot(p_ref[...], onehot,
                            preferred_element_type=jnp.float32)

    @pl.when(ht == pl.num_programs(1) - 1)
    def _():
        o_ref[...] = acc_ref[...].astype(o_ref.dtype)


def _round_up(x, m):
    return ((x + m - 1) // m) * m


def barycenter_forward(param, idx0, idx1):
    """param: (N, C, H, W); idx0, idx1: (K,) int.  Returns (N, C, K)."""
    N, C, H, W = param.shape
    NC = N * C
    K = int(idx0.shape[0])
    HW = H * W
    itemsize = jnp.dtype(param.dtype).itemsize

    # Defensive clamp (out-of-range indices would otherwise gather garbage).
    idx0 = jnp.clip(idx0.astype(jnp.int32), 0, H - 1)
    idx1 = jnp.clip(idx1.astype(jnp.int32), 0, W - 1)
    fidx = idx0 * W + idx1                                    # (K,) flat index

    # --- K tiling: TK points per grid step, lane-dense output ---------------
    TK = 128
    K_pad = max(TK, _round_up(K, TK))
    fidx_p = jnp.pad(fidx, (0, K_pad - K)).reshape(1, K_pad)  # pad gathers col 0

    # --- HW tiling: largest THW (multiple of 128) fitting a VMEM budget -----
    ONEHOT_BUDGET = 2 << 20   # bytes for the (THW, TK) one-hot / iota temps
    PARAM_BUDGET = 16 << 20   # bytes for the double-buffered (NC, THW) block
    max_thw = min(ONEHOT_BUDGET // (TK * 4),
                  PARAM_BUDGET // (2 * NC * itemsize))
    thw_cap = max(128, (max_thw // 128) * 128)
    THW = min(thw_cap, _round_up(HW, 128))
    HW_pad = _round_up(HW, THW)

    p_flat = param.reshape(NC, HW)
    if HW_pad != HW:
        p_flat = jnp.pad(p_flat, ((0, 0), (0, HW_pad - HW)))

    num_k = K_pad // TK
    num_hw = HW_pad // THW

    out = pl.pallas_call(
        _gather_kernel,
        out_shape=jax.ShapeDtypeStruct((NC, K_pad), param.dtype),
        grid_spec=pltpu.PrefetchScalarGridSpec(
            num_scalar_prefetch=0,
            grid=(num_k, num_hw),
            in_specs=[
                # (1, TK) tile of flat gather indices for this K-tile
                pl.BlockSpec((1, TK), lambda kt, ht: (0, kt)),
                # (NC, THW) slab of the parameter; constant across K-tiles when
                # num_hw == 1 => loaded once and kept resident in VMEM.
                pl.BlockSpec((NC, THW), lambda kt, ht: (0, ht)),
            ],
            out_specs=pl.BlockSpec((NC, TK), lambda kt, ht: (0, kt)),
            scratch_shapes=[pltpu.VMEM((NC, TK), jnp.float32)],
        ),
        compiler_params=pltpu.CompilerParams(
            dimension_semantics=("parallel", "arbitrary"),
            vmem_limit_bytes=48 << 20,
        ),
    )(fidx_p, p_flat)

    # (NC, K_pad) -> slice padding -> (N, C, K); NC split is contiguous (free).
    return out[:, :K].reshape(N, C, K)


if __name__ == "__main__":
    # Deterministic init, mirroring BarycenterModel.__init__(content, noise=True)
    N, C, H, W, K = 2, 4, 16, 16, 8
    key = jax.random.PRNGKey(0)
    k_content, k_noise, k_i0, k_i1 = jax.random.split(key, 4)

    content = jax.random.normal(k_content, (N, C, H, W), dtype=jnp.float32)
    noise = True
    param = content + (0.1 * jax.random.normal(k_noise, (N, C, H, W),
                                               dtype=jnp.float32)
                       if noise else 0.0)

    idx0 = jax.random.randint(k_i0, (K,), 0, H, dtype=jnp.int32)
    idx1 = jax.random.randint(k_i1, (K,), 0, W, dtype=jnp.int32)

    out = barycenter_forward(param, idx0, idx1)
    out = jax.block_until_ready(out)

    # Reference (plain JAX advanced indexing, same as torch's param[:, :, i0, i1])
    ref = param[:, :, idx0, idx1]
    assert out.shape == (N, C, K), out.shape
    assert jnp.allclose(out, ref, atol=1e-6), "mismatch vs reference gather"

    print("KERNEL_OK")
</pallas_src>

<mosaic_0001>
module attributes {stable_mosaic.version = 11 : i64} {
  func.func @_gather_kernel(%arg0: i32, %arg1: i32, %arg2: memref<1x128xi32, #tpu.memory_space<vmem>>, %arg3: memref<8x256xf32, #tpu.memory_space<vmem>>, %arg4: memref<8x128xf32, #tpu.memory_space<vmem>>, %arg5: memref<8x128xf32, #tpu.memory_space<vmem>>) attributes {dimension_semantics = [#tpu.dimension_semantics<parallel>, #tpu.dimension_semantics<arbitrary>], iteration_bounds = array<i64: 1, 1>, scalar_prefetch = 0 : i64, scratch_operands = 1 : i64, tpu.core_type = #tpu.core_type<tc>, window_params = [{transform_indices = @transform_0, window_bounds = array<i64: 1, 128>}, {transform_indices = @transform_1, window_bounds = array<i64: 8, 256>}, {transform_indices = @transform_2, window_bounds = array<i64: 8, 128>}]} {
    %c0_i32 = arith.constant 0 : i32
    %0 = arith.cmpi eq, %arg1, %c0_i32 : i32
    %1 = arith.extui %0 : i1 to i32
    %c0_i32_0 = arith.constant 0 : i32
    %2 = arith.cmpi ne, %1, %c0_i32_0 : i32
    scf.if %2 {
      %cst_10 = arith.constant 0.000000e+00 : f32
      %22 = vector.broadcast %cst_10 : f32 to vector<8x128xf32>
      %c0_11 = arith.constant 0 : index
      %c0_12 = arith.constant 0 : index
      %23 = vector.load %arg5[%c0_11, %c0_12] : memref<8x128xf32, #tpu.memory_space<vmem>>, vector<8x128xf32>
      tpu.vector_store %arg5[%c0_11, %c0_12], %22 {strides = array<i32>} : memref<8x128xf32, #tpu.memory_space<vmem>>, vector<8x128xf32>,
    } else {
    }
    %c0 = arith.constant 0 : index
    %c0_1 = arith.constant 0 : index
    %3 = vector.load %arg2[%c0, %c0_1] : memref<1x128xi32, #tpu.memory_space<vmem>>, vector<1x128xi32>
    %4 = vector.shape_cast %3 : vector<1x128xi32> to vector<128xi32>
    %5 = tpu.iota {dimensions = array<i32: 0>} : vector<256x128xi32>
    %c256_i32 = arith.constant 256 : i32
    %6 = arith.muli %arg1, %c256_i32 : i32
    %7 = vector.broadcast %6 : i32 to vector<256x128xi32>
    %8 = arith.addi %5, %7 : vector<256x128xi32>
    %9 = vector.shape_cast %4 : vector<128xi32> to vector<1x128xi32>
    %10 = vector.broadcast %9 : vector<1x128xi32> to vector<256x128xi32>
    %11 = arith.cmpi eq, %8, %10 : vector<256x128xi32>
    %12 = arith.extui %11 : vector<256x128xi1> to vector<256x128xi32>
    %13 = arith.sitofp %12 : vector<256x128xi32> to vector<256x128xf32>
    %c0_2 = arith.constant 0 : index
    %c0_3 = arith.constant 0 : index
    %14 = vector.load %arg5[%c0_2, %c0_3] : memref<8x128xf32, #tpu.memory_space<vmem>>, vector<8x128xf32>
    %c0_4 = arith.constant 0 : index
    %c0_5 = arith.constant 0 : index
    %15 = vector.load %arg3[%c0_4, %c0_5] : memref<8x256xf32, #tpu.memory_space<vmem>>, vector<8x256xf32>
    %cst = arith.constant dense<0.000000e+00> : vector<8x128xf32>
    %16 = tpu.matmul %15, %13, %cst {dimension_numbers = #tpu.dot_dimension_numbers<[1], [0], [0], [1], [0, 0, 1, 1], [], []>} : vector<8x256xf32>, vector<256x128xf32>, vector<8x128xf32> -> vector<8x128xf32>
    %17 = arith.addf %14, %16 : vector<8x128xf32>
    %c0_6 = arith.constant 0 : index
    %c0_7 = arith.constant 0 : index
    %18 = vector.load %arg5[%c0_6, %c0_7] : memref<8x128xf32, #tpu.memory_space<vmem>>, vector<8x128xf32>
    tpu.vector_store %arg5[%c0_6, %c0_7], %17 {strides = array<i32>} : memref<8x128xf32, #tpu.memory_space<vmem>>, vector<8x128xf32>,
    %c0_i32_8 = arith.constant 0 : i32
    %19 = arith.cmpi eq, %arg1, %c0_i32_8 : i32
    %20 = arith.extui %19 : i1 to i32
    %c0_i32_9 = arith.constant 0 : i32
    %21 = arith.cmpi ne, %20, %c0_i32_9 : i32
    scf.if %21 {
      %c0_10 = arith.constant 0 : index
      %c0_11 = arith.constant 0 : index
      %22 = vector.load %arg5[%c0_10, %c0_11] : memref<8x128xf32, #tpu.memory_space<vmem>>, vector<8x128xf32>
      %c0_12 = arith.constant 0 : index
      %c0_13 = arith.constant 0 : index
      %23 = vector.load %arg4[%c0_12, %c0_13] : memref<8x128xf32, #tpu.memory_space<vmem>>, vector<8x128xf32>
      tpu.vector_store %arg4[%c0_12, %c0_13], %22 {strides = array<i32>} : memref<8x128xf32, #tpu.memory_space<vmem>>, vector<8x128xf32>,
    } else {
    }
    return
  }
  func.func @transform_0(%arg0: i32, %arg1: i32) -> (i32, i32) {
    %c0_i32 = arith.constant 0 : i32
    %c0_i32_0 = arith.constant 0 : i32
    return %c0_i32, %arg0 : i32, i32
  }
  func.func @transform_1(%arg0: i32, %arg1: i32) -> (i32, i32) {
    %c0_i32 = arith.constant 0 : i32
    %c0_i32_0 = arith.constant 0 : i32
    return %c0_i32, %arg1 : i32, i32
  }
  func.func @transform_2(%arg0: i32, %arg1: i32) -> (i32, i32) {
    %c0_i32 = arith.constant 0 : i32
    %c0_i32_0 = arith.constant 0 : i32
    return %c0_i32, %arg0 : i32, i32
  }
}

</mosaic_0001>

<llo_original>
// kernel: tpu_custom_call.1
$region0: #{tpu_custom_call.1}
  #allocation0 [shape = 'u32[]', space=smem, size = 0x4, offset = 0x4, fixed_abs, tag = 'smem constant byte address 0x4 - core index']
  #allocation1 [shape = 'u32[144,128]{1,0:T(1,128)}', space=vmem, size = 0x12000, scoped, tag = 'internal scratch']
  #allocation2 [shape = 'f32[8,128]{1,0:T(8,128)}', space=vmem, size = 0x1000, scoped, tag = 'scratch operand']
  %s0 = inlined_call_operand.hbm [shape: s32[1,128], index: 0, kind: input, shape index: {}]
  %s1 = inlined_call_operand.hbm [shape: f32[8,256], index: 1, kind: input, shape index: {}]
  %s2 = inlined_call_operand.hbm [shape: f32[8,128], index: 2, kind: output, shape index: {}]
  %s3 = sld [smem:[#allocation0]]
  $region34: #{tpu_custom_call.1} parent=0
    _
  %s5 = ssub.s32 1, %s3
  %s6 = scalar_select 0, %s5, %s3
  $region1: #{tpu_custom_call.1} parent=0
    #allocation3 [shape = 'u8[512]{0}', space=vmem, size = 0x400, scoped, tag = 'input window, operand 0, single buffered']
    #allocation4 [shape = 's32[1]{0}', space=sflag, size = 0x4, scoped, tag = 'scoped memory for tpu_custom_call.1']
    #allocation5 [shape = 's32[1]{0}', space=sflag, size = 0x4, scoped, tag = 'scoped memory for tpu_custom_call.1']
    #allocation6 [shape = 'u8[8192]{0}', space=vmem, size = 0x2000, scoped, tag = 'input window, operand 1, single buffered']
    #allocation7 [shape = 's32[1]{0}', space=sflag, size = 0x4, scoped, tag = 'scoped memory for tpu_custom_call.1']
    #allocation8 [shape = 'u8[4096]{0}', space=vmem, size = 0x1000, scoped, tag = 'output window, operand 0, single buffered']
    %7 = vsyncpa [#allocation4], 0
    %8 = vsyncpa [#allocation7], 0
    %9 = vsyncpa [#allocation5], 0
    // Predicated region
    $region2: #{tpu_custom_call.1} parent=1 // pred_check
      _
    $region3: #{tpu_custom_call.1} parent=1 // pred_check_branch
      %11 = sbr.rel (0) target = $region5
    $region4: #{tpu_custom_call.1} parent=1 // pred_region
      %s13 = ssub.s32 16, 16
      %14 = vsyncadd [#allocation4], %s13
      %s16 = sshll.u32 [#allocation3], 4
      %s17 = int_to_ptr.vmem [resolvable:$true] %s16
      %19 = dma.hbm_to_vmem [thread:$0]  %s0, 16, %s17, [#allocation4]
    $region5: #{tpu_custom_call.1} parent=1 // pred_fallthru
      _
    // Predicated region
    $region6: #{tpu_custom_call.1} parent=1 // pred_check
      _
    $region7: #{tpu_custom_call.1} parent=1 // pred_check_branch
      %21 = sbr.rel (0) target = $region9
    $region8: #{tpu_custom_call.1} parent=1 // pred_region
      %s23 = ssub.s32 256, 256
      %24 = vsyncadd [#allocation7], %s23
      %s26 = sshll.u32 [#allocation6], 4
      %s27 = int_to_ptr.vmem [resolvable:$true] %s26
      %29 = dma.hbm_to_vmem [thread:$0]  %s1, 256, %s27, [#allocation7]
    $region9: #{tpu_custom_call.1} parent=1 // pred_fallthru
      _
    // Predicated region
    $region10: #{tpu_custom_call.1} parent=1 // pred_check
      _
    $region11: #{tpu_custom_call.1} parent=1 // pred_check_branch
      %31 = sbr.rel (0) target = $region13
    $region12: #{tpu_custom_call.1} parent=1 // pred_region
      %32 = dma.done [#allocation4], 16
    $region13: #{tpu_custom_call.1} parent=1 // pred_fallthru
      _
    // Predicated region
    $region14: #{tpu_custom_call.1} parent=1 // pred_check
      _
    $region15: #{tpu_custom_call.1} parent=1 // pred_check_branch
      %34 = sbr.rel (0) target = $region17
    $region16: #{tpu_custom_call.1} parent=1 // pred_region
      %35 = dma.done [#allocation7], 256
    $region17: #{tpu_custom_call.1} parent=1 // pred_fallthru
      _
    %p36 = scmp.eq.s32.totalorder 0, 0
    // Predicated region
    $region18: #{tpu_custom_call.1} parent=1 // pred_check
      %p37 = pneg %p36
    $region19: #{tpu_custom_call.1} parent=1 // pred_check_branch
      %39 = sbr.rel (%p37) target = $region21
    $region20: #{tpu_custom_call.1} parent=1 // pred_region
      %40 = vst [vmem:[#allocation2] sm:$0xff] 0.0
    $region21: #{tpu_custom_call.1} parent=1 // pred_fallthru
      _
    %v41 = vld [vmem:[#allocation3] sm:$0x1]
    %v42 = vlaneseq
    %v43 = vshrl.u32 %v42, 7
    %v44 = vadd.s32 %v43, 8
    %v45 = vadd.s32 %v43, 16
    %v46 = vadd.s32 %v43, 24
    %v47 = vadd.s32 %v43, 32
    %v48 = vadd.s32 %v43, 40
    %v49 = vadd.s32 %v43, 48
    %v50 = vadd.s32 %v43, 56
    %v51 = vadd.s32 %v43, 64
    %v52 = vadd.s32 %v43, 72
    %v53 = vadd.s32 %v43, 80
    %v54 = vadd.s32 %v43, 88
    %v55 = vadd.s32 %v43, 96
    %v56 = vadd.s32 %v43, 104
    %v57 = vadd.s32 %v43, 112
    %v58 = vadd.s32 %v43, 120
    %v59 = vadd.s32 %v43, 128
    %v60 = vadd.s32 %v43, 136
    %v61 = vadd.s32 %v43, 144
    %v62 = vadd.s32 %v43, 152
    %v63 = vadd.s32 %v43, 160
    %v64 = vadd.s32 %v43, 168
    %v65 = vadd.s32 %v43, 176
    %v66 = vadd.s32 %v43, 184
    %v67 = vadd.s32 %v43, 192
    %v68 = vadd.s32 %v43, 200
    %v69 = vadd.s32 %v43, 208
    %v70 = vadd.s32 %v43, 216
    %v71 = vadd.s32 %v43, 224
    %v72 = vadd.s32 %v43, 232
    %v73 = vadd.s32 %v43, 240
    %v74 = vadd.s32 %v43, 248
    %s75 = smul.u32 0, 256
    %v76 = vstv %s75
    %v77 = vadd.s32 %v43, %v76
    %v78 = vadd.s32 %v44, %v76
    %v79 = vadd.s32 %v45, %v76
    %v80 = vadd.s32 %v46, %v76
    %v81 = vadd.s32 %v47, %v76
    %v82 = vadd.s32 %v48, %v76
    %v83 = vadd.s32 %v49, %v76
    %v84 = vadd.s32 %v50, %v76
    %v85 = vadd.s32 %v51, %v76
    %v86 = vadd.s32 %v52, %v76
    %v87 = vadd.s32 %v53, %v76
    %v88 = vadd.s32 %v54, %v76
    %v89 = vadd.s32 %v55, %v76
    %v90 = vadd.s32 %v56, %v76
    %v91 = vadd.s32 %v57, %v76
    %v92 = vadd.s32 %v58, %v76
    %v93 = vadd.s32 %v59, %v76
    %v94 = vadd.s32 %v60, %v76
    %v95 = vadd.s32 %v61, %v76
    %v96 = vadd.s32 %v62, %v76
    %v97 = vadd.s32 %v63, %v76
    %v98 = vadd.s32 %v64, %v76
    %v99 = vadd.s32 %v65, %v76
    %v100 = vadd.s32 %v66, %v76
    %v101 = vadd.s32 %v67, %v76
    %v102 = vadd.s32 %v68, %v76
    %v103 = vadd.s32 %v69, %v76
    %v104 = vadd.s32 %v70, %v76
    %v105 = vadd.s32 %v71, %v76
    %v106 = vadd.s32 %v72, %v76
    %v107 = vadd.s32 %v73, %v76
    %v108 = vadd.s32 %v74, %v76
    %v109 = vlaneseq
    %v110 = vshrl.u32 %v109, 7
    %v111 = vsub.s32 0, %v110
    %v112 = vrot.slane %v41, %v111
    %vm113 = vcmp.eq.s32.totalorder %v77, %v112
    %vm114 = vcmp.eq.s32.totalorder %v78, %v112
    %vm115 = vcmp.eq.s32.totalorder %v79, %v112
    %vm116 = vcmp.eq.s32.totalorder %v80, %v112
    %vm117 = vcmp.eq.s32.totalorder %v81, %v112
    %vm118 = vcmp.eq.s32.totalorder %v82, %v112
    %vm119 = vcmp.eq.s32.totalorder %v83, %v112
    %vm120 = vcmp.eq.s32.totalorder %v84, %v112
    %vm121 = vcmp.eq.s32.totalorder %v85, %v112
    %vm122 = vcmp.eq.s32.totalorder %v86, %v112
    %vm123 = vcmp.eq.s32.totalorder %v87, %v112
    %vm124 = vcmp.eq.s32.totalorder %v88, %v112
    %vm125 = vcmp.eq.s32.totalorder %v89, %v112
    %vm126 = vcmp.eq.s32.totalorder %v90, %v112
    %vm127 = vcmp.eq.s32.totalorder %v91, %v112
    %vm128 = vcmp.eq.s32.totalorder %v92, %v112
    %vm129 = vcmp.eq.s32.totalorder %v93, %v112
    %vm130 = vcmp.eq.s32.totalorder %v94, %v112
    %vm131 = vcmp.eq.s32.totalorder %v95, %v112
    %vm132 = vcmp.eq.s32.totalorder %v96, %v112
    %vm133 = vcmp.eq.s32.totalorder %v97, %v112
    %vm134 = vcmp.eq.s32.totalorder %v98, %v112
    %vm135 = vcmp.eq.s32.totalorder %v99, %v112
    %vm136 = vcmp.eq.s32.totalorder %v100, %v112
    %vm137 = vcmp.eq.s32.totalorder %v101, %v112
    %vm138 = vcmp.eq.s32.totalorder %v102, %v112
    %vm139 = vcmp.eq.s32.totalorder %v103, %v112
    %vm140 = vcmp.eq.s32.totalorder %v104, %v112
    %vm141 = vcmp.eq.s32.totalorder %v105, %v112
    %vm142 = vcmp.eq.s32.totalorder %v106, %v112
    %vm143 = vcmp.eq.s32.totalorder %v107, %v112
    %vm144 = vcmp.eq.s32.totalorder %v108, %v112
    %v145 = vsel %vm113, 1, 0
    %v146 = vsel %vm114, 1, 0
    %v147 = vsel %vm115, 1, 0
    %v148 = vsel %vm116, 1, 0
    %v149 = vsel %vm117, 1, 0
    %v150 = vsel %vm118, 1, 0
    %v151 = vsel %vm119, 1, 0
    %v152 = vsel %vm120, 1, 0
    %v153 = vsel %vm121, 1, 0
    %v154 = vsel %vm122, 1, 0
    %v155 = vsel %vm123, 1, 0
    %v156 = vsel %vm124, 1, 0
    %v157 = vsel %vm125, 1, 0
    %v158 = vsel %vm126, 1, 0
    %v159 = vsel %vm127, 1, 0
    %v160 = vsel %vm128, 1, 0
    %v161 = vsel %vm129, 1, 0
    %v162 = vsel %vm130, 1, 0
    %v163 = vsel %vm131, 1, 0
    %v164 = vsel %vm132, 1, 0
    %v165 = vsel %vm133, 1, 0
    %v166 = vsel %vm134, 1, 0
    %v167 = vsel %vm135, 1, 0
    %v168 = vsel %vm136, 1, 0
    %v169 = vsel %vm137, 1, 0
    %v170 = vsel %vm138, 1, 0
    %v171 = vsel %vm139, 1, 0
    %v172 = vsel %vm140, 1, 0
    %v173 = vsel %vm141, 1, 0
    %v174 = vsel %vm142, 1, 0
    %v175 = vsel %vm143, 1, 0
    %v176 = vsel %vm144, 1, 0
    %v177 = vcvt.s32.f32 %v145
    %v178 = vcvt.s32.f32 %v146
    %v179 = vcvt.s32.f32 %v147
    %v180 = vcvt.s32.f32 %v148
    %v181 = vcvt.s32.f32 %v149
    %v182 = vcvt.s32.f32 %v150
    %v183 = vcvt.s32.f32 %v151
    %v184 = vcvt.s32.f32 %v152
    %v185 = vcvt.s32.f32 %v153
    %v186 = vcvt.s32.f32 %v154
    %v187 = vcvt.s32.f32 %v155
    %v188 = vcvt.s32.f32 %v156
    %v189 = vcvt.s32.f32 %v157
    %v190 = vcvt.s32.f32 %v158
    %v191 = vcvt.s32.f32 %v159
    %v192 = vcvt.s32.f32 %v160
    %v193 = vcvt.s32.f32 %v161
    %v194 = vcvt.s32.f32 %v162
    %v195 = vcvt.s32.f32 %v163
    %v196 = vcvt.s32.f32 %v164
    %v197 = vcvt.s32.f32 %v165
    %v198 = vcvt.s32.f32 %v166
    %v199 = vcvt.s32.f32 %v167
    %v200 = vcvt.s32.f32 %v168
    %v201 = vcvt.s32.f32 %v169
    %v202 = vcvt.s32.f32 %v170
    %v203 = vcvt.s32.f32 %v171
    %v204 = vcvt.s32.f32 %v172
    %v205 = vcvt.s32.f32 %v173
    %v206 = vcvt.s32.f32 %v174
    %v207 = vcvt.s32.f32 %v175
    %v208 = vcvt.s32.f32 %v176
    %v209 = vld [vmem:[#allocation2] sm:$0xff]
    %v210 = vld [vmem:[#allocation6] sm:$0xff]
    %v211 = vld [vmem:[#allocation6 + $0x8] sm:$0xff]
    %212 = vmatprep.subr.mxu0 0.0
    %213 = vmatpush1.msra.mxu0 %v192
    %214 = vmatprep.subr.mxu0 0.0
    %215 = vmatpush1.msra.mxu0 %v191
    %216 = vmatprep.subr.mxu0 0.0
    %217 = vmatpush1.msra.mxu0 %v190
    %218 = vmatprep.subr.mxu0 0.0
    %219 = vmatpush1.msra.mxu0 %v189
    %220 = vmatprep.subr.mxu0 0.0
    %221 = vmatpush1.msra.mxu0 %v188
    %222 = vmatprep.subr.mxu0 0.0
    %223 = vmatpush1.msra.mxu0 %v187
    %224 = vmatprep.subr.mxu0 0.0
    %225 = vmatpush1.msra.mxu0 %v186
    %226 = vmatprep.subr.mxu0 0.0
    %227 = vmatpush1.msra.mxu0 %v185
    %228 = vmatprep.subr.mxu0 0.0
    %229 = vmatpush1.msra.mxu0 %v184
    %230 = vmatprep.subr.mxu0 0.0
    %231 = vmatpush1.msra.mxu0 %v183
    %232 = vmatprep.subr.mxu0 0.0
    %233 = vmatpush1.msra.mxu0 %v182
    %234 = vmatprep.subr.mxu0 0.0
    %235 = vmatpush1.msra.mxu0 %v181
    %236 = vmatprep.subr.mxu0 0.0
    %237 = vmatpush1.msra.mxu0 %v180
    %238 = vmatprep.subr.mxu0 0.0
    %239 = vmatpush1.msra.mxu0 %v179
    %240 = vmatprep.subr.mxu0 0.0
    %241 = vmatpush1.msra.mxu0 %v178
    %242 = vmatprep.subr.mxu0 0.0
    %243 = vmatpush1.msra.mxu0 %v177
    %244 = vmatprep.subr.mxu0 0.0
    %245 = vmatpush2.msra.mxu0 %v208
    %246 = vmatprep.subr.mxu0 0.0
    %247 = vmatpush2.msra.mxu0 %v207
    %248 = vmatprep.subr.mxu0 0.0
    %249 = vmatpush2.msra.mxu0 %v206
    %250 = vmatprep.subr.mxu0 0.0
    %251 = vmatpush2.msra.mxu0 %v205
    %252 = vmatprep.subr.mxu0 0.0
    %253 = vmatpush2.msra.mxu0 %v204
    %254 = vmatprep.subr.mxu0 0.0
    %255 = vmatpush2.msra.mxu0 %v203
    %256 = vmatprep.subr.mxu0 0.0
    %257 = vmatpush2.msra.mxu0 %v202
    %258 = vmatprep.subr.mxu0 0.0
    %259 = vmatpush2.msra.mxu0 %v201
    %260 = vmatprep.subr.mxu0 0.0
    %261 = vmatpush2.msra.mxu0 %v200
    %262 = vmatprep.subr.mxu0 0.0
    %263 = vmatpush2.msra.mxu0 %v199
    %264 = vmatprep.subr.mxu0 0.0
    %265 = vmatpush2.msra.mxu0 %v198
    %266 = vmatprep.subr.mxu0 0.0
    %267 = vmatpush2.msra.mxu0 %v197
    %268 = vmatprep.subr.mxu0 0.0
    %269 = vmatpush2.msra.mxu0 %v196
    %270 = vmatprep.subr.mxu0 0.0
    %271 = vmatpush2.msra.mxu0 %v195
    %272 = vmatprep.subr.mxu0 0.0
    %273 = vmatpush2.msra.mxu0 %v194
    %274 = vmatprep.subr.mxu0 0.0
    %275 = vmatpush2.msra.mxu0 %v193
    %276 = vmatprep.mubr.f32.mxu0 %v211
    %277 = vmatmul.mubr.f32.gmra.mxu0 %v210
    %v278 = vpop.f32.mrf.mxu0
    %v279 = vadd.f32 0.0, %v278
    %v280 = vpop.f32.mrf.mxu0
    %281 = vdwg.mxu0
    %v282 = vadd.f32 %v209, %v279
    %283 = vst [vmem:[#allocation2] sm:$0xff] %v282
    // Predicated region
    $region22: #{tpu_custom_call.1} parent=1 // pred_check
      %p284 = pneg %p36
    $region23: #{tpu_custom_call.1} parent=1 // pred_check_branch
      %286 = sbr.rel (%p284) target = $region25
    $region24: #{tpu_custom_call.1} parent=1 // pred_region
      %v287 = vld [vmem:[#allocation2] sm:$0xff]
      %288 = vst [vmem:[#allocation8] sm:$0xff] %v287
    $region25: #{tpu_custom_call.1} parent=1 // pred_fallthru
      _
    // Predicated region
    $region26: #{tpu_custom_call.1} parent=1 // pred_check
      _
    $region27: #{tpu_custom_call.1} parent=1 // pred_check_branch
      %290 = sbr.rel (0) target = $region29
    $region28: #{tpu_custom_call.1} parent=1 // pred_region
      %s292 = ssub.s32 128, 128
      %293 = vsyncadd [#allocation5], %s292
      %s295 = sshll.u32 [#allocation8], 4
      %s296 = int_to_ptr.vmem [resolvable:$true] %s295
      %298 = dma.vmem_to_hbm [thread:$0]  %s296, 128, %s2, [#allocation5]
    $region29: #{tpu_custom_call.1} parent=1 // pred_fallthru
      _
    // Predicated region
    $region30: #{tpu_custom_call.1} parent=1 // pred_check
      _
    $region31: #{tpu_custom_call.1} parent=1 // pred_check_branch
      %300 = sbr.rel (0) target = $region33
    $region32: #{tpu_custom_call.1} parent=1 // pred_region
      %301 = dma.done [#allocation5], 128
    $region33: #{tpu_custom_call.1} parent=1 // pred_fallthru
      _
    %302 = vsyncpa [#allocation4], 1
    %303 = vsyncpa [#allocation7], 1
    %304 = vsyncpa [#allocation5], 1

</llo_original>
